<compile_context>
chip_gen: v7x
topology: tpu7x:2x2x1
jax: 0.10.0
libtpu: 0.0.40
codegen_flags: <defaults>
</compile_context>

<pallas_src>
import math
from functools import partial

import jax
import jax.numpy as jnp
from jax.experimental import pallas as pl
from jax.experimental.pallas import tpu as pltpu


def _mha_fused_kernel(x_ref, wqkv_ref, o_ref, *, batch, seq, num_heads, dp):
    # x_ref:    (B*T, d_in)      flattened batch*seq rows
    # wqkv_ref: (d_in, 3*H*DP)   [Q heads | K heads | V heads], head blocks 128-padded,
    #                            1/sqrt(d_out) already folded into the Q columns
    # o_ref:    (B*T, H*DP)      head h context lives in columns [h*DP, (h+1)*DP)
    qkv = jnp.dot(x_ref[...], wqkv_ref[...],
                  preferred_element_type=jnp.float32)            # (B*T, 3*H*DP)
    hdp = num_heads * dp
    for b in range(batch):              # static, tiny B; larger B -> row-tile grid axis
        rows = slice(b * seq, (b + 1) * seq)
        for h in range(num_heads):      # static, tiny H
            q = qkv[rows, h * dp:(h + 1) * dp]                   # (T, DP), 128-aligned
            k = qkv[rows, hdp + h * dp: hdp + (h + 1) * dp]
            v = qkv[rows, 2 * hdp + h * dp: 2 * hdp + (h + 1) * dp]
            # scores = q @ k^T without an explicit XLU transpose (contract on DP;
            # the zero-padded lanes contribute nothing).
            s = jax.lax.dot_general(q, k, (((1,), (1,)), ((), ())),
                                    preferred_element_type=jnp.float32)   # (T, T)
            # No causal mask: the reference's masked_fill is non-inplace & discarded.
            m = jnp.max(s, axis=-1, keepdims=True)
            e = jnp.exp(s - m)
            inv = pl.reciprocal(jnp.sum(e, axis=-1, keepdims=True), approx=True)
            a = e * inv
            # TODO(synk): nn.Dropout on attention weights treated as identity (eval/p=0).
            o_ref[rows, h * dp:(h + 1) * dp] = jnp.dot(
                a, v, preferred_element_type=jnp.float32)        # 128-wide lane-dense store


@jax.jit
def multi_head_attention(x, wq, wk, wv):
    """x: (B, T, d_in); wq/wk/wv: (H, d_out, d_in) -> (B, T, H*d_out)."""
    B, T, d_in = x.shape
    H, d_out, _ = wq.shape
    dp = ((d_out + 127) // 128) * 128            # per-head width padded to 128 lanes
    scale = 1.0 / math.sqrt(d_out)               # reference divides by keys.shape[-1]**0.5

    def fuse(w):
        # (H, d_out, d_in) -> (d_in, H*dp); head h occupies cols [h*dp, h*dp + d_out).
        wt = jnp.transpose(w, (2, 0, 1))                         # (d_in, H, d_out)
        wt = jnp.pad(wt, ((0, 0), (0, 0), (0, dp - d_out)))
        return wt.reshape(d_in, H * dp)

    # One-time layout plumbing: fused [Q | K | V] projection, scale folded into Q.
    w_qkv = jnp.concatenate([fuse(wq * scale), fuse(wk), fuse(wv)], axis=-1)

    x2d = x.reshape(B * T, d_in)                 # free reshape on contiguous HBM

    kernel = partial(_mha_fused_kernel, batch=B, seq=T, num_heads=H, dp=dp)

    out_pad = pl.pallas_call(
        kernel,
        out_shape=jax.ShapeDtypeStruct((B * T, H * dp), jnp.float32),
        grid_spec=pltpu.PrefetchScalarGridSpec(
            num_scalar_prefetch=0,
            grid=(1,),                           # single step: everything fits VMEM here
            in_specs=[
                pl.BlockSpec((B * T, d_in), lambda i: (0, 0)),
                pl.BlockSpec((d_in, 3 * H * dp), lambda i: (0, 0)),
            ],
            out_specs=pl.BlockSpec((B * T, H * dp), lambda i: (0, 0)),
        ),
        compiler_params=pltpu.CompilerParams(
            dimension_semantics=("arbitrary",)),
    )(x2d, w_qkv)

    # Drop the lane padding (a no-op when d_out is already a multiple of 128).
    return out_pad.reshape(B, T, H, dp)[..., :d_out].reshape(B, T, H * d_out)


def _reference(x, wq, wk, wv):
    """Pure-JAX replica of the PyTorch forward (for verification)."""
    H, d_out, _ = wq.shape
    outs = []
    for h in range(H):
        q = x @ wq[h].T
        k = x @ wk[h].T
        v = x @ wv[h].T
        s = jnp.einsum("btd,bsd->bts", q, k) / math.sqrt(d_out)
        a = jax.nn.softmax(s, axis=-1)        # no causal mask (faithful to reference)
        outs.append(jnp.einsum("bts,bsd->btd", a, v))
    return jnp.concatenate(outs, axis=-1)


if __name__ == "__main__":
    # Inputs exactly as in the reference script.
    inputs = jnp.array(
        [[0.43, 0.15, 0.89],
         [0.55, 0.87, 0.66],
         [0.57, 0.85, 0.64],
         [0.22, 0.58, 0.33],
         [0.77, 0.25, 0.10],
         [0.05, 0.80, 0.55]], dtype=jnp.float32)
    x = jnp.stack((inputs, inputs), axis=0)        # (B=2, T=6, d_in=3)

    d_in, d_out, num_heads = 3, 2, 2

    # Deterministic parameter init (mimics nn.Linear: U(-1/sqrt(d_in), 1/sqrt(d_in))).
    key = jax.random.PRNGKey(0)
    kq, kk, kv = jax.random.split(key, 3)
    bound = 1.0 / math.sqrt(d_in)
    wq = jax.random.uniform(kq, (num_heads, d_out, d_in), jnp.float32, -bound, bound)
    wk = jax.random.uniform(kk, (num_heads, d_out, d_in), jnp.float32, -bound, bound)
    wv = jax.random.uniform(kv, (num_heads, d_out, d_in), jnp.float32, -bound, bound)

    out = jax.block_until_ready(multi_head_attention(x, wq, wk, wv))

    ref = _reference(x, wq, wk, wv)
    assert out.shape == (2, 6, num_heads * d_out), out.shape
    # approx reciprocal (EUP) is slightly looser than exact divide; compare at 2e-3.
    assert jnp.allclose(out, ref, atol=2e-3, rtol=2e-3), "mismatch vs reference"

    print("KERNEL_OK")
</pallas_src>

<mosaic_0001>
module attributes {stable_mosaic.version = 11 : i64} {
  func.func @_mha_fused_kernel(%arg0: i32, %arg1: memref<12x3xf32, #tpu.memory_space<vmem>>, %arg2: memref<3x768xf32, #tpu.memory_space<vmem>>, %arg3: memref<12x256xf32, #tpu.memory_space<vmem>>) attributes {dimension_semantics = [#tpu.dimension_semantics<arbitrary>], iteration_bounds = array<i64: 1>, scalar_prefetch = 0 : i64, scratch_operands = 0 : i64, tpu.core_type = #tpu.core_type<tc>, window_params = [{pipeline_mode = #tpu.pipeline_mode<synchronous>, transform_indices = @transform_0, window_bounds = array<i64: 12, 3>}, {pipeline_mode = #tpu.pipeline_mode<synchronous>, transform_indices = @transform_1, window_bounds = array<i64: 3, 768>}, {pipeline_mode = #tpu.pipeline_mode<synchronous>, transform_indices = @transform_2, window_bounds = array<i64: 12, 256>}]} {
    %c0 = arith.constant 0 : index
    %c0_0 = arith.constant 0 : index
    %0 = vector.load %arg1[%c0, %c0_0] : memref<12x3xf32, #tpu.memory_space<vmem>>, vector<12x3xf32>
    %c0_1 = arith.constant 0 : index
    %c0_2 = arith.constant 0 : index
    %1 = vector.load %arg2[%c0_1, %c0_2] : memref<3x768xf32, #tpu.memory_space<vmem>>, vector<3x768xf32>
    %cst = arith.constant dense<0.000000e+00> : vector<12x768xf32>
    %2 = tpu.matmul %0, %1, %cst {dimension_numbers = #tpu.dot_dimension_numbers<[1], [0], [0], [1], [0, 0, 1, 1], [], []>} : vector<12x3xf32>, vector<3x768xf32>, vector<12x768xf32> -> vector<12x768xf32>
    %3 = vector.extract_strided_slice %2 {offsets = [0, 0], sizes = [6, 128], strides = [1, 1]} : vector<12x768xf32> to vector<6x128xf32>
    %4 = vector.extract_strided_slice %2 {offsets = [0, 256], sizes = [6, 128], strides = [1, 1]} : vector<12x768xf32> to vector<6x128xf32>
    %5 = vector.extract_strided_slice %2 {offsets = [0, 512], sizes = [6, 128], strides = [1, 1]} : vector<12x768xf32> to vector<6x128xf32>
    %cst_3 = arith.constant dense<0.000000e+00> : vector<6x6xf32>
    %6 = tpu.matmul %3, %4, %cst_3 {dimension_numbers = #tpu.dot_dimension_numbers<[1], [1], [0], [0], [0, 0, 1, 0], [], []>} : vector<6x128xf32>, vector<6x128xf32>, vector<6x6xf32> -> vector<6x6xf32>
    %cst_4 = arith.constant dense<0xFF800000> : vector<6xf32>
    %7 = vector.multi_reduction <maximumf>, %6, %cst_4 [1] : vector<6x6xf32> to vector<6xf32>
    %8 = vector.shape_cast %7 : vector<6xf32> to vector<6x1xf32>
    %9 = vector.broadcast %8 : vector<6x1xf32> to vector<6x6xf32>
    %10 = arith.subf %6, %9 : vector<6x6xf32>
    %11 = math.exp %10 : vector<6x6xf32>
    %cst_5 = arith.constant dense<0.000000e+00> : vector<6xf32>
    %12 = vector.multi_reduction <add>, %11, %cst_5 [1] : vector<6x6xf32> to vector<6xf32>
    %13 = vector.shape_cast %12 : vector<6xf32> to vector<6x1xf32>
    %14 = tpu.reciprocal %13 {approx = true} : vector<6x1xf32> -> vector<6x1xf32>
    %15 = vector.broadcast %14 : vector<6x1xf32> to vector<6x6xf32>
    %16 = arith.mulf %11, %15 : vector<6x6xf32>
    %cst_6 = arith.constant dense<0.000000e+00> : vector<6x128xf32>
    %17 = tpu.matmul %16, %5, %cst_6 {dimension_numbers = #tpu.dot_dimension_numbers<[1], [0], [0], [1], [0, 0, 1, 1], [], []>} : vector<6x6xf32>, vector<6x128xf32>, vector<6x128xf32> -> vector<6x128xf32>
    %c0_7 = arith.constant 0 : index
    %c0_8 = arith.constant 0 : index
    %18 = vector.load %arg3[%c0_7, %c0_8] : memref<12x256xf32, #tpu.memory_space<vmem>>, vector<6x128xf32>
    tpu.vector_store %arg3[%c0_7, %c0_8], %17 {strides = array<i32>} : memref<12x256xf32, #tpu.memory_space<vmem>>, vector<6x128xf32>,
    %19 = vector.extract_strided_slice %2 {offsets = [0, 128], sizes = [6, 128], strides = [1, 1]} : vector<12x768xf32> to vector<6x128xf32>
    %20 = vector.extract_strided_slice %2 {offsets = [0, 384], sizes = [6, 128], strides = [1, 1]} : vector<12x768xf32> to vector<6x128xf32>
    %21 = vector.extract_strided_slice %2 {offsets = [0, 640], sizes = [6, 128], strides = [1, 1]} : vector<12x768xf32> to vector<6x128xf32>
    %cst_9 = arith.constant dense<0.000000e+00> : vector<6x6xf32>
    %22 = tpu.matmul %19, %20, %cst_9 {dimension_numbers = #tpu.dot_dimension_numbers<[1], [1], [0], [0], [0, 0, 1, 0], [], []>} : vector<6x128xf32>, vector<6x128xf32>, vector<6x6xf32> -> vector<6x6xf32>
    %cst_10 = arith.constant dense<0xFF800000> : vector<6xf32>
    %23 = vector.multi_reduction <maximumf>, %22, %cst_10 [1] : vector<6x6xf32> to vector<6xf32>
    %24 = vector.shape_cast %23 : vector<6xf32> to vector<6x1xf32>
    %25 = vector.broadcast %24 : vector<6x1xf32> to vector<6x6xf32>
    %26 = arith.subf %22, %25 : vector<6x6xf32>
    %27 = math.exp %26 : vector<6x6xf32>
    %cst_11 = arith.constant dense<0.000000e+00> : vector<6xf32>
    %28 = vector.multi_reduction <add>, %27, %cst_11 [1] : vector<6x6xf32> to vector<6xf32>
    %29 = vector.shape_cast %28 : vector<6xf32> to vector<6x1xf32>
    %30 = tpu.reciprocal %29 {approx = true} : vector<6x1xf32> -> vector<6x1xf32>
    %31 = vector.broadcast %30 : vector<6x1xf32> to vector<6x6xf32>
    %32 = arith.mulf %27, %31 : vector<6x6xf32>
    %cst_12 = arith.constant dense<0.000000e+00> : vector<6x128xf32>
    %33 = tpu.matmul %32, %21, %cst_12 {dimension_numbers = #tpu.dot_dimension_numbers<[1], [0], [0], [1], [0, 0, 1, 1], [], []>} : vector<6x6xf32>, vector<6x128xf32>, vector<6x128xf32> -> vector<6x128xf32>
    %c0_13 = arith.constant 0 : index
    %c128 = arith.constant 128 : index
    %34 = vector.load %arg3[%c0_13, %c128] : memref<12x256xf32, #tpu.memory_space<vmem>>, vector<6x128xf32>
    tpu.vector_store %arg3[%c0_13, %c128], %33 {strides = array<i32>} : memref<12x256xf32, #tpu.memory_space<vmem>>, vector<6x128xf32>,
    %35 = vector.extract_strided_slice %2 {offsets = [6, 0], sizes = [6, 128], strides = [1, 1]} : vector<12x768xf32> to vector<6x128xf32>
    %36 = vector.extract_strided_slice %2 {offsets = [6, 256], sizes = [6, 128], strides = [1, 1]} : vector<12x768xf32> to vector<6x128xf32>
    %37 = vector.extract_strided_slice %2 {offsets = [6, 512], sizes = [6, 128], strides = [1, 1]} : vector<12x768xf32> to vector<6x128xf32>
    %cst_14 = arith.constant dense<0.000000e+00> : vector<6x6xf32>
    %38 = tpu.matmul %35, %36, %cst_14 {dimension_numbers = #tpu.dot_dimension_numbers<[1], [1], [0], [0], [0, 0, 1, 0], [], []>} : vector<6x128xf32>, vector<6x128xf32>, vector<6x6xf32> -> vector<6x6xf32>
    %cst_15 = arith.constant dense<0xFF800000> : vector<6xf32>
    %39 = vector.multi_reduction <maximumf>, %38, %cst_15 [1] : vector<6x6xf32> to vector<6xf32>
    %40 = vector.shape_cast %39 : vector<6xf32> to vector<6x1xf32>
    %41 = vector.broadcast %40 : vector<6x1xf32> to vector<6x6xf32>
    %42 = arith.subf %38, %41 : vector<6x6xf32>
    %43 = math.exp %42 : vector<6x6xf32>
    %cst_16 = arith.constant dense<0.000000e+00> : vector<6xf32>
    %44 = vector.multi_reduction <add>, %43, %cst_16 [1] : vector<6x6xf32> to vector<6xf32>
    %45 = vector.shape_cast %44 : vector<6xf32> to vector<6x1xf32>
    %46 = tpu.reciprocal %45 {approx = true} : vector<6x1xf32> -> vector<6x1xf32>
    %47 = vector.broadcast %46 : vector<6x1xf32> to vector<6x6xf32>
    %48 = arith.mulf %43, %47 : vector<6x6xf32>
    %cst_17 = arith.constant dense<0.000000e+00> : vector<6x128xf32>
    %49 = tpu.matmul %48, %37, %cst_17 {dimension_numbers = #tpu.dot_dimension_numbers<[1], [0], [0], [1], [0, 0, 1, 1], [], []>} : vector<6x6xf32>, vector<6x128xf32>, vector<6x128xf32> -> vector<6x128xf32>
    %c6 = arith.constant 6 : index
    %c0_18 = arith.constant 0 : index
    %50 = vector.load %arg3[%c6, %c0_18] : memref<12x256xf32, #tpu.memory_space<vmem>>, vector<6x128xf32>
    tpu.vector_store %arg3[%c6, %c0_18], %49 {strides = array<i32>} : memref<12x256xf32, #tpu.memory_space<vmem>>, vector<6x128xf32>,
    %51 = vector.extract_strided_slice %2 {offsets = [6, 128], sizes = [6, 128], strides = [1, 1]} : vector<12x768xf32> to vector<6x128xf32>
    %52 = vector.extract_strided_slice %2 {offsets = [6, 384], sizes = [6, 128], strides = [1, 1]} : vector<12x768xf32> to vector<6x128xf32>
    %53 = vector.extract_strided_slice %2 {offsets = [6, 640], sizes = [6, 128], strides = [1, 1]} : vector<12x768xf32> to vector<6x128xf32>
    %cst_19 = arith.constant dense<0.000000e+00> : vector<6x6xf32>
    %54 = tpu.matmul %51, %52, %cst_19 {dimension_numbers = #tpu.dot_dimension_numbers<[1], [1], [0], [0], [0, 0, 1, 0], [], []>} : vector<6x128xf32>, vector<6x128xf32>, vector<6x6xf32> -> vector<6x6xf32>
    %cst_20 = arith.constant dense<0xFF800000> : vector<6xf32>
    %55 = vector.multi_reduction <maximumf>, %54, %cst_20 [1] : vector<6x6xf32> to vector<6xf32>
    %56 = vector.shape_cast %55 : vector<6xf32> to vector<6x1xf32>
    %57 = vector.broadcast %56 : vector<6x1xf32> to vector<6x6xf32>
    %58 = arith.subf %54, %57 : vector<6x6xf32>
    %59 = math.exp %58 : vector<6x6xf32>
    %cst_21 = arith.constant dense<0.000000e+00> : vector<6xf32>
    %60 = vector.multi_reduction <add>, %59, %cst_21 [1] : vector<6x6xf32> to vector<6xf32>
    %61 = vector.shape_cast %60 : vector<6xf32> to vector<6x1xf32>
    %62 = tpu.reciprocal %61 {approx = true} : vector<6x1xf32> -> vector<6x1xf32>
    %63 = vector.broadcast %62 : vector<6x1xf32> to vector<6x6xf32>
    %64 = arith.mulf %59, %63 : vector<6x6xf32>
    %cst_22 = arith.constant dense<0.000000e+00> : vector<6x128xf32>
    %65 = tpu.matmul %64, %53, %cst_22 {dimension_numbers = #tpu.dot_dimension_numbers<[1], [0], [0], [1], [0, 0, 1, 1], [], []>} : vector<6x6xf32>, vector<6x128xf32>, vector<6x128xf32> -> vector<6x128xf32>
    %c6_23 = arith.constant 6 : index
    %c128_24 = arith.constant 128 : index
    %66 = vector.load %arg3[%c6_23, %c128_24] : memref<12x256xf32, #tpu.memory_space<vmem>>, vector<6x128xf32>
    tpu.vector_store %arg3[%c6_23, %c128_24], %65 {strides = array<i32>} : memref<12x256xf32, #tpu.memory_space<vmem>>, vector<6x128xf32>,
    return
  }
  func.func @transform_0(%arg0: i32) -> (i32, i32) {
    %c0_i32 = arith.constant 0 : i32
    %c0_i32_0 = arith.constant 0 : i32
    %c0_i32_1 = arith.constant 0 : i32
    return %c0_i32, %c0_i32_0 : i32, i32
  }
  func.func @transform_1(%arg0: i32) -> (i32, i32) {
    %c0_i32 = arith.constant 0 : i32
    %c0_i32_0 = arith.constant 0 : i32
    %c0_i32_1 = arith.constant 0 : i32
    return %c0_i32, %c0_i32_0 : i32, i32
  }
  func.func @transform_2(%arg0: i32) -> (i32, i32) {
    %c0_i32 = arith.constant 0 : i32
    %c0_i32_0 = arith.constant 0 : i32
    %c0_i32_1 = arith.constant 0 : i32
    return %c0_i32, %c0_i32_0 : i32, i32
  }
}

</mosaic_0001>

<llo_original>
// kernel: multi_head_attention.1
$region0: #{multi_head_attention.1}
  #allocation0 [shape = 'u32[]', space=smem, size = 0x4, offset = 0x4, fixed_abs, tag = 'smem constant byte address 0x4 - core index']
  #allocation1 [shape = 'u32[144,128]{1,0:T(1,128)}', space=vmem, size = 0x12000, scoped, tag = 'internal scratch']
  %s0 = inlined_call_operand.vmem [shape: f32[12,3], index: 0, kind: input, shape index: {}]
  %s1 = inlined_call_operand.vmem [shape: f32[3,768], index: 1, kind: input, shape index: {}]
  %s2 = inlined_call_operand.vmem [shape: f32[12,256], index: 2, kind: output, shape index: {}]
  %s3 = sld [smem:[#allocation0]]
  $region18: #{multi_head_attention.1} parent=0
    _
  %s5 = ssub.s32 1, %s3
  %s6 = scalar_select 0, %s5, %s3
  // Predicated region
  $region2: #{multi_head_attention.1} parent=0 // pred_check
    _
  $region3: #{multi_head_attention.1} parent=0 // pred_check_branch
    %8 = sbr.rel (0) target = $region5
  $region4: #{multi_head_attention.1} parent=0 // pred_region
    _
  $region5: #{multi_head_attention.1} parent=0 // pred_fallthru
    _
  // Predicated region
  $region6: #{multi_head_attention.1} parent=0 // pred_check
    _
  $region7: #{multi_head_attention.1} parent=0 // pred_check_branch
    %10 = sbr.rel (0) target = $region9
  $region8: #{multi_head_attention.1} parent=0 // pred_region
    _
  $region9: #{multi_head_attention.1} parent=0 // pred_fallthru
    _
  %v11 = vld [vmem:[%s0] sm:$0xff]
  %v12 = vld [vmem:[%s0 + $0x8] sm:$0xf]
  %v13 = vld [vmem:[%s1] sm:$0x77]
  %v14 = vld [vmem:[%s1 + $0x8] sm:$0x77]
  %v15 = vld [vmem:[%s1 + $0x10] sm:$0x77]
  %v19 = vcombine.high %v13, %v13
  %v20 = vcombine.high %v14, %v14
  %v21 = vcombine.high %v15, %v15
  %vm22 = vcmask 23552
  %v24 = vsel %vm22, %v11, 0
  %v27 = vsel %vm22, %v12, 0
  %vm29 = vcmask 1042432
  %v30 = vsel %vm29, %v13, 0
  %v32 = vsel %vm29, %v19, 0
  %v34 = vsel %vm29, %v14, 0
  %v36 = vsel %vm29, %v20, 0
  %v38 = vsel %vm29, %v15, 0
  %v40 = vsel %vm29, %v21, 0
  %42 = vmatprep.subr.mxu0 %v32
  %43 = vmatpush1.msra.mxu0 %v30
  %44 = vmatprep.subr.mxu0 0.0
  %45 = vmatpush1.msra.mxu0 0.0
  %46 = vmatprep.subr.mxu0 0.0
  %47 = vmatpush1.msra.mxu0 0.0
  %48 = vmatprep.subr.mxu0 0.0
  %49 = vmatpush1.msra.mxu0 0.0
  %50 = vmatprep.subr.mxu0 0.0
  %51 = vmatpush1.msra.mxu0 0.0
  %52 = vmatprep.subr.mxu0 0.0
  %53 = vmatpush1.msra.mxu0 0.0
  %54 = vmatprep.subr.mxu0 0.0
  %55 = vmatpush1.msra.mxu0 0.0
  %56 = vmatprep.subr.mxu0 0.0
  %57 = vmatpush1.msra.mxu0 0.0
  %58 = vmatprep.subr.mxu0 0.0
  %59 = vmatpush1.msra.mxu0 0.0
  %60 = vmatprep.subr.mxu0 0.0
  %61 = vmatpush1.msra.mxu0 0.0
  %62 = vmatprep.subr.mxu0 0.0
  %63 = vmatpush1.msra.mxu0 0.0
  %64 = vmatprep.subr.mxu0 0.0
  %65 = vmatpush1.msra.mxu0 0.0
  %66 = vmatprep.subr.mxu0 0.0
  %67 = vmatpush1.msra.mxu0 0.0
  %68 = vmatprep.subr.mxu0 0.0
  %69 = vmatpush1.msra.mxu0 0.0
  %70 = vmatprep.subr.mxu0 0.0
  %71 = vmatpush1.msra.mxu0 0.0
  %72 = vmatprep.subr.mxu0 0.0
  %73 = vmatpush1.msra.mxu0 0.0
  %74 = vmatprep.subr.mxu0 0.0
  %75 = vmatpush1.msra.mxu0 0.0
  %76 = vmatprep.subr.mxu0 0.0
  %77 = vmatpush1.msra.mxu0 0.0
  %78 = vmatprep.subr.mxu0 0.0
  %79 = vmatpush1.msra.mxu0 0.0
  %80 = vmatprep.subr.mxu0 0.0
  %81 = vmatpush1.msra.mxu0 0.0
  %82 = vmatprep.subr.mxu0 0.0
  %83 = vmatpush1.msra.mxu0 0.0
  %84 = vmatprep.subr.mxu0 0.0
  %85 = vmatpush1.msra.mxu0 0.0
  %86 = vmatprep.subr.mxu0 0.0
  %87 = vmatpush1.msra.mxu0 0.0
  %88 = vmatprep.subr.mxu0 0.0
  %89 = vmatpush1.msra.mxu0 0.0
  %90 = vmatprep.subr.mxu0 0.0
  %91 = vmatpush1.msra.mxu0 0.0
  %92 = vmatprep.subr.mxu0 0.0
  %93 = vmatpush1.msra.mxu0 0.0
  %94 = vmatprep.subr.mxu0 0.0
  %95 = vmatpush1.msra.mxu0 0.0
  %96 = vmatprep.subr.mxu0 0.0
  %97 = vmatpush1.msra.mxu0 0.0
  %98 = vmatprep.subr.mxu0 0.0
  %99 = vmatpush1.msra.mxu0 0.0
  %100 = vmatprep.subr.mxu0 0.0
  %101 = vmatpush1.msra.mxu0 0.0
  %102 = vmatprep.subr.mxu0 0.0
  %103 = vmatpush1.msra.mxu0 0.0
  %104 = vmatprep.subr.mxu0 0.0
  %105 = vmatpush1.msra.mxu0 0.0
  %106 = vmatprep.mubr.f32.mxu0 0.0
  %107 = vmatmul.mubr.f32.gmra.mrb[0].mxu0 %v24
  %v108 = vpop.f32.mrb[0].mxu0
  %v109 = vadd.f32 0.0, %v108
  %v110 = vpop.f32.mrb[0].mxu0
  %v111 = vadd.f32 0.0, %v110
  %112 = vmatprep.mubr.f32.mxu0 0.0
  %113 = vmatmul.mubr.f32.gmra.mrb[0].mxu0 %v27
  %v114 = vpop.f32.mrb[0].mxu0
  %v115 = vadd.f32 0.0, %v114
  %v116 = vpop.f32.mrb[0].mxu0
  %v117 = vadd.f32 0.0, %v116
  %118 = vdwg.mxu0
  %119 = vmatprep.subr.mxu0 %v36
  %120 = vmatpush1.msra.mxu0 %v34
  %121 = vmatprep.subr.mxu0 0.0
  %122 = vmatpush1.msra.mxu0 0.0
  %123 = vmatprep.subr.mxu0 0.0
  %124 = vmatpush1.msra.mxu0 0.0
  %125 = vmatprep.subr.mxu0 0.0
  %126 = vmatpush1.msra.mxu0 0.0
  %127 = vmatprep.subr.mxu0 0.0
  %128 = vmatpush1.msra.mxu0 0.0
  %129 = vmatprep.subr.mxu0 0.0
  %130 = vmatpush1.msra.mxu0 0.0
  %131 = vmatprep.subr.mxu0 0.0
  %132 = vmatpush1.msra.mxu0 0.0
  %133 = vmatprep.subr.mxu0 0.0
  %134 = vmatpush1.msra.mxu0 0.0
  %135 = vmatprep.subr.mxu0 0.0
  %136 = vmatpush1.msra.mxu0 0.0
  %137 = vmatprep.subr.mxu0 0.0
  %138 = vmatpush1.msra.mxu0 0.0
  %139 = vmatprep.subr.mxu0 0.0
  %140 = vmatpush1.msra.mxu0 0.0
  %141 = vmatprep.subr.mxu0 0.0
  %142 = vmatpush1.msra.mxu0 0.0
  %143 = vmatprep.subr.mxu0 0.0
  %144 = vmatpush1.msra.mxu0 0.0
  %145 = vmatprep.subr.mxu0 0.0
  %146 = vmatpush1.msra.mxu0 0.0
  %147 = vmatprep.subr.mxu0 0.0
  %148 = vmatpush1.msra.mxu0 0.0
  %149 = vmatprep.subr.mxu0 0.0
  %150 = vmatpush1.msra.mxu0 0.0
  %151 = vmatprep.subr.mxu0 0.0
  %152 = vmatpush1.msra.mxu0 0.0
  %153 = vmatprep.subr.mxu0 0.0
  %154 = vmatpush1.msra.mxu0 0.0
  %155 = vmatprep.subr.mxu0 0.0
  %156 = vmatpush1.msra.mxu0 0.0
  %157 = vmatprep.subr.mxu0 0.0
  %158 = vmatpush1.msra.mxu0 0.0
  %159 = vmatprep.subr.mxu0 0.0
  %160 = vmatpush1.msra.mxu0 0.0
  %161 = vmatprep.subr.mxu0 0.0
  %162 = vmatpush1.msra.mxu0 0.0
  %163 = vmatprep.subr.mxu0 0.0
  %164 = vmatpush1.msra.mxu0 0.0
  %165 = vmatprep.subr.mxu0 0.0
  %166 = vmatpush1.msra.mxu0 0.0
  %167 = vmatprep.subr.mxu0 0.0
  %168 = vmatpush1.msra.mxu0 0.0
  %169 = vmatprep.subr.mxu0 0.0
  %170 = vmatpush1.msra.mxu0 0.0
  %171 = vmatprep.subr.mxu0 0.0
  %172 = vmatpush1.msra.mxu0 0.0
  %173 = vmatprep.subr.mxu0 0.0
  %174 = vmatpush1.msra.mxu0 0.0
  %175 = vmatprep.subr.mxu0 0.0
  %176 = vmatpush1.msra.mxu0 0.0
  %177 = vmatprep.subr.mxu0 0.0
  %178 = vmatpush1.msra.mxu0 0.0
  %179 = vmatprep.subr.mxu0 0.0
  %180 = vmatpush1.msra.mxu0 0.0
  %181 = vmatprep.subr.mxu0 0.0
  %182 = vmatpush1.msra.mxu0 0.0
  %183 = vmatprep.mubr.f32.mxu0 0.0
  %184 = vmatmul.mubr.f32.gmra.mrb[0].mxu0 %v24
  %v185 = vpop.f32.mrb[0].mxu0
  %v186 = vadd.f32 0.0, %v185
  %v187 = vpop.f32.mrb[0].mxu0
  %v188 = vadd.f32 0.0, %v187
  %189 = vmatprep.mubr.f32.mxu0 0.0
  %190 = vmatmul.mubr.f32.gmra.mrb[0].mxu0 %v27
  %v191 = vpop.f32.mrb[0].mxu0
  %v192 = vadd.f32 0.0, %v191
  %v193 = vpop.f32.mrb[0].mxu0
  %v194 = vadd.f32 0.0, %v193
  %195 = vdwg.mxu0
  %196 = vmatprep.subr.mxu0 %v40
  %197 = vmatpush1.msra.mxu0 %v38
  %198 = vmatprep.subr.mxu0 0.0
  %199 = vmatpush1.msra.mxu0 0.0
  %200 = vmatprep.subr.mxu0 0.0
  %201 = vmatpush1.msra.mxu0 0.0
  %202 = vmatprep.subr.mxu0 0.0
  %203 = vmatpush1.msra.mxu0 0.0
  %204 = vmatprep.subr.mxu0 0.0
  %205 = vmatpush1.msra.mxu0 0.0
  %206 = vmatprep.subr.mxu0 0.0
  %207 = vmatpush1.msra.mxu0 0.0
  %208 = vmatprep.subr.mxu0 0.0
  %209 = vmatpush1.msra.mxu0 0.0
  %210 = vmatprep.subr.mxu0 0.0
  %211 = vmatpush1.msra.mxu0 0.0
  %212 = vmatprep.subr.mxu0 0.0
  %213 = vmatpush1.msra.mxu0 0.0
  %214 = vmatprep.subr.mxu0 0.0
  %215 = vmatpush1.msra.mxu0 0.0
  %216 = vmatprep.subr.mxu0 0.0
  %217 = vmatpush1.msra.mxu0 0.0
  %218 = vmatprep.subr.mxu0 0.0
  %219 = vmatpush1.msra.mxu0 0.0
  %220 = vmatprep.subr.mxu0 0.0
  %221 = vmatpush1.msra.mxu0 0.0
  %222 = vmatprep.subr.mxu0 0.0
  %223 = vmatpush1.msra.mxu0 0.0
  %224 = vmatprep.subr.mxu0 0.0
  %225 = vmatpush1.msra.mxu0 0.0
  %226 = vmatprep.subr.mxu0 0.0
  %227 = vmatpush1.msra.mxu0 0.0
  %228 = vmatprep.subr.mxu0 0.0
  %229 = vmatpush1.msra.mxu0 0.0
  %230 = vmatprep.subr.mxu0 0.0
  %231 = vmatpush1.msra.mxu0 0.0
  %232 = vmatprep.subr.mxu0 0.0
  %233 = vmatpush1.msra.mxu0 0.0
  %234 = vmatprep.subr.mxu0 0.0
  %235 = vmatpush1.msra.mxu0 0.0
  %236 = vmatprep.subr.mxu0 0.0
  %237 = vmatpush1.msra.mxu0 0.0
  %238 = vmatprep.subr.mxu0 0.0
  %239 = vmatpush1.msra.mxu0 0.0
  %240 = vmatprep.subr.mxu0 0.0
  %241 = vmatpush1.msra.mxu0 0.0
  %242 = vmatprep.subr.mxu0 0.0
  %243 = vmatpush1.msra.mxu0 0.0
  %244 = vmatprep.subr.mxu0 0.0
  %245 = vmatpush1.msra.mxu0 0.0
  %246 = vmatprep.subr.mxu0 0.0
  %247 = vmatpush1.msra.mxu0 0.0
  %248 = vmatprep.subr.mxu0 0.0
  %249 = vmatpush1.msra.mxu0 0.0
  %250 = vmatprep.subr.mxu0 0.0
  %251 = vmatpush1.msra.mxu0 0.0
  %252 = vmatprep.subr.mxu0 0.0
  %253 = vmatpush1.msra.mxu0 0.0
  %254 = vmatprep.subr.mxu0 0.0
  %255 = vmatpush1.msra.mxu0 0.0
  %256 = vmatprep.subr.mxu0 0.0
  %257 = vmatpush1.msra.mxu0 0.0
  %258 = vmatprep.subr.mxu0 0.0
  %259 = vmatpush1.msra.mxu0 0.0
  %260 = vmatprep.mubr.f32.mxu0 0.0
  %261 = vmatmul.mubr.f32.gmra.mrb[0].mxu0 %v24
  %v262 = vpop.f32.mrb[0].mxu0
  %v263 = vadd.f32 0.0, %v262
  %v264 = vpop.f32.mrb[0].mxu0
  %v265 = vadd.f32 0.0, %v264
  %266 = vmatprep.mubr.f32.mxu0 0.0
  %267 = vmatmul.mubr.f32.gmra.mrb[0].mxu0 %v27
  %v268 = vpop.f32.mrb[0].mxu0
  %v269 = vadd.f32 0.0, %v268
  %v270 = vpop.f32.mrb[0].mxu0
  %v271 = vadd.f32 0.0, %v270
  %272 = vdwg.mxu0
  %273 = vmatprep.subr.mxu0 0.0
  %274 = vmatpush1.xpose.msra.mxu0 %v186
  %275 = vmatprep.subr.mxu0 0.0
  %276 = vmatpush1.xpose.msra.mxu0 0.0
  %277 = vmatprep.subr.mxu0 0.0
  %278 = vmatpush1.xpose.msra.mxu0 0.0
  %279 = vmatprep.subr.mxu0 0.0
  %280 = vmatpush1.xpose.msra.mxu0 0.0
  %281 = vmatprep.subr.mxu0 0.0
  %282 = vmatpush1.xpose.msra.mxu0 0.0
  %283 = vmatprep.subr.mxu0 0.0
  %284 = vmatpush1.xpose.msra.mxu0 0.0
  %285 = vmatprep.subr.mxu0 0.0
  %286 = vmatpush1.xpose.msra.mxu0 0.0
  %287 = vmatprep.subr.mxu0 0.0
  %288 = vmatpush1.xpose.msra.mxu0 0.0
  %289 = vmatprep.subr.mxu0 0.0
  %290 = vmatpush1.xpose.msra.mxu0 0.0
  %291 = vmatprep.subr.mxu0 0.0
  %292 = vmatpush1.xpose.msra.mxu0 0.0
  %293 = vmatprep.subr.mxu0 0.0
  %294 = vmatpush1.xpose.msra.mxu0 0.0
  %295 = vmatprep.subr.mxu0 0.0
  %296 = vmatpush1.xpose.msra.mxu0 0.0
  %297 = vmatprep.subr.mxu0 0.0
  %298 = vmatpush1.xpose.msra.mxu0 0.0
  %299 = vmatprep.subr.mxu0 0.0
  %300 = vmatpush1.xpose.msra.mxu0 0.0
  %301 = vmatprep.subr.mxu0 0.0
  %302 = vmatpush1.xpose.msra.mxu0 0.0
  %303 = vmatprep.subr.mxu0 0.0
  %304 = vmatpush1.xpose.msra.mxu0 0.0
  %305 = vmatprep.subr.mxu0 0.0
  %306 = vmatpush1.xpose.msra.mxu0 0.0
  %307 = vmatprep.subr.mxu0 0.0
  %308 = vmatpush1.xpose.msra.mxu0 0.0
  %309 = vmatprep.subr.mxu0 0.0
  %310 = vmatpush1.xpose.msra.mxu0 0.0
  %311 = vmatprep.subr.mxu0 0.0
  %312 = vmatpush1.xpose.msra.mxu0 0.0
  %313 = vmatprep.subr.mxu0 0.0
  %314 = vmatpush1.xpose.msra.mxu0 0.0
  %315 = vmatprep.subr.mxu0 0.0
  %316 = vmatpush1.xpose.msra.mxu0 0.0
  %317 = vmatprep.subr.mxu0 0.0
  %318 = vmatpush1.xpose.msra.mxu0 0.0
  %319 = vmatprep.subr.mxu0 0.0
  %320 = vmatpush1.xpose.msra.mxu0 0.0
  %321 = vmatprep.subr.mxu0 0.0
  %322 = vmatpush1.xpose.msra.mxu0 0.0
  %323 = vmatprep.subr.mxu0 0.0
  %324 = vmatpush1.xpose.msra.mxu0 0.0
  %325 = vmatprep.subr.mxu0 0.0
  %326 = vmatpush1.xpose.msra.mxu0 0.0
  %327 = vmatprep.subr.mxu0 0.0
  %328 = vmatpush1.xpose.msra.mxu0 0.0
  %329 = vmatprep.subr.mxu0 0.0
  %330 = vmatpush1.xpose.msra.mxu0 0.0
  %331 = vmatprep.subr.mxu0 0.0
  %332 = vmatpush1.xpose.msra.mxu0 0.0
  %333 = vmatprep.subr.mxu0 0.0
  %334 = vmatpush1.xpose.msra.mxu0 0.0
  %335 = vmatprep.subr.mxu0 0.0
  %336 = vmatpush1.xpose.msra.mxu0 0.0
  %337 = vmatprep.mubr.f32.mxu0 0.0
  %338 = vmatmul.mubr.f32.gmra.mrb[0].mxu0 %v109
  %v339 = vpop.f32.mrb[0].mxu0
  %v340 = vadd.f32 0.0, %v339
  %v341 = vpop.f32.mrb[0].mxu0
  %342 = vdwg.mxu0
  %vm343 = vcmask 46080
  %v344 = vsel %vm343, %v340, -inf
  %345 = vmax.xlane.f32.xlu0 %v344
  %v346 = vpop.xlane.xlu0 %345
  %v347 = vsub.f32 %v340, %v346
  %v348 = vmul.f32 %v347, 1.442695
  %v349 = vpow.pop %v348
  %v350 = vsel %vm343, %v349, 0.0
  %351 = vadd.xlane.f32.xlu0 %v350
  %v352 = vpop.xlane.xlu0 %351
  %v353 = vrcp.pop %v352
  %v354 = vmul.f32 %v349, %v353
  %vm355 = vcmask 48128
  %v357 = vsel %vm355, %v354, 0
  %vm359 = vcmask 1045504
  %v361 = vsel %vm359, %v263, 0
  %363 = vmatprep.subr.mxu0 0.0
  %364 = vmatpush1.msra.mxu0 %v361
  %365 = vmatprep.subr.mxu0 0.0
  %366 = vmatpush1.msra.mxu0 0.0
  %367 = vmatprep.subr.mxu0 0.0
  %368 = vmatpush1.msra.mxu0 0.0
  %369 = vmatprep.subr.mxu0 0.0
  %370 = vmatpush1.msra.mxu0 0.0
  %371 = vmatprep.subr.mxu0 0.0
  %372 = vmatpush1.msra.mxu0 0.0
  %373 = vmatprep.subr.mxu0 0.0
  %374 = vmatpush1.msra.mxu0 0.0
  %375 = vmatprep.subr.mxu0 0.0
  %376 = vmatpush1.msra.mxu0 0.0
  %377 = vmatprep.subr.mxu0 0.0
  %378 = vmatpush1.msra.mxu0 0.0
  %379 = vmatprep.subr.mxu0 0.0
  %380 = vmatpush1.msra.mxu0 0.0
  %381 = vmatprep.subr.mxu0 0.0
  %382 = vmatpush1.msra.mxu0 0.0
  %383 = vmatprep.subr.mxu0 0.0
  %384 = vmatpush1.msra.mxu0 0.0
  %385 = vmatprep.subr.mxu0 0.0
  %386 = vmatpush1.msra.mxu0 0.0
  %387 = vmatprep.subr.mxu0 0.0
  %388 = vmatpush1.msra.mxu0 0.0
  %389 = vmatprep.subr.mxu0 0.0
  %390 = vmatpush1.msra.mxu0 0.0
  %391 = vmatprep.subr.mxu0 0.0
  %392 = vmatpush1.msra.mxu0 0.0
  %393 = vmatprep.subr.mxu0 0.0
  %394 = vmatpush1.msra.mxu0 0.0
  %395 = vmatprep.subr.mxu0 0.0
  %396 = vmatpush1.msra.mxu0 0.0
  %397 = vmatprep.subr.mxu0 0.0
  %398 = vmatpush1.msra.mxu0 0.0
  %399 = vmatprep.subr.mxu0 0.0
  %400 = vmatpush1.msra.mxu0 0.0
  %401 = vmatprep.subr.mxu0 0.0
  %402 = vmatpush1.msra.mxu0 0.0
  %403 = vmatprep.subr.mxu0 0.0
  %404 = vmatpush1.msra.mxu0 0.0
  %405 = vmatprep.subr.mxu0 0.0
  %406 = vmatpush1.msra.mxu0 0.0
  %407 = vmatprep.subr.mxu0 0.0
  %408 = vmatpush1.msra.mxu0 0.0
  %409 = vmatprep.subr.mxu0 0.0
  %410 = vmatpush1.msra.mxu0 0.0
  %411 = vmatprep.subr.mxu0 0.0
  %412 = vmatpush1.msra.mxu0 0.0
  %413 = vmatprep.subr.mxu0 0.0
  %414 = vmatpush1.msra.mxu0 0.0
  %415 = vmatprep.subr.mxu0 0.0
  %416 = vmatpush1.msra.mxu0 0.0
  %417 = vmatprep.subr.mxu0 0.0
  %418 = vmatpush1.msra.mxu0 0.0
  %419 = vmatprep.subr.mxu0 0.0
  %420 = vmatpush1.msra.mxu0 0.0
  %421 = vmatprep.subr.mxu0 0.0
  %422 = vmatpush1.msra.mxu0 0.0
  %423 = vmatprep.subr.mxu0 0.0
  %424 = vmatpush1.msra.mxu0 0.0
  %425 = vmatprep.subr.mxu0 0.0
  %426 = vmatpush1.msra.mxu0 0.0
  %427 = vmatprep.mubr.f32.mxu0 0.0
  %428 = vmatmul.mubr.f32.gmra.mrb[0].mxu0 %v357
  %v429 = vpop.f32.mrb[0].mxu0
  %v430 = vadd.f32 0.0, %v429
  %v431 = vpop.f32.mrb[0].mxu0
  %432 = vdwg.mxu0
  %433 = vst [vmem:[%s2] sm:$0x3f] %v430
  %434 = vmatprep.subr.mxu0 0.0
  %435 = vmatpush1.xpose.msra.mxu0 %v188
  %436 = vmatprep.subr.mxu0 0.0
  %437 = vmatpush1.xpose.msra.mxu0 0.0
  %438 = vmatprep.subr.mxu0 0.0
  %439 = vmatpush1.xpose.msra.mxu0 0.0
  %440 = vmatprep.subr.mxu0 0.0
  %441 = vmatpush1.xpose.msra.mxu0 0.0
  %442 = vmatprep.subr.mxu0 0.0
  %443 = vmatpush1.xpose.msra.mxu0 0.0
  %444 = vmatprep.subr.mxu0 0.0
  %445 = vmatpush1.xpose.msra.mxu0 0.0
  %446 = vmatprep.subr.mxu0 0.0
  %447 = vmatpush1.xpose.msra.mxu0 0.0
  %448 = vmatprep.subr.mxu0 0.0
  %449 = vmatpush1.xpose.msra.mxu0 0.0
  %450 = vmatprep.subr.mxu0 0.0
  %451 = vmatpush1.xpose.msra.mxu0 0.0
  %452 = vmatprep.subr.mxu0 0.0
  %453 = vmatpush1.xpose.msra.mxu0 0.0
  %454 = vmatprep.subr.mxu0 0.0
  %455 = vmatpush1.xpose.msra.mxu0 0.0
  %456 = vmatprep.subr.mxu0 0.0
  %457 = vmatpush1.xpose.msra.mxu0 0.0
  %458 = vmatprep.subr.mxu0 0.0
  %459 = vmatpush1.xpose.msra.mxu0 0.0
  %460 = vmatprep.subr.mxu0 0.0
  %461 = vmatpush1.xpose.msra.mxu0 0.0
  %462 = vmatprep.subr.mxu0 0.0
  %463 = vmatpush1.xpose.msra.mxu0 0.0
  %464 = vmatprep.subr.mxu0 0.0
  %465 = vmatpush1.xpose.msra.mxu0 0.0
  %466 = vmatprep.subr.mxu0 0.0
  %467 = vmatpush1.xpose.msra.mxu0 0.0
  %468 = vmatprep.subr.mxu0 0.0
  %469 = vmatpush1.xpose.msra.mxu0 0.0
  %470 = vmatprep.subr.mxu0 0.0
  %471 = vmatpush1.xpose.msra.mxu0 0.0
  %472 = vmatprep.subr.mxu0 0.0
  %473 = vmatpush1.xpose.msra.mxu0 0.0
  %474 = vmatprep.subr.mxu0 0.0
  %475 = vmatpush1.xpose.msra.mxu0 0.0
  %476 = vmatprep.subr.mxu0 0.0
  %477 = vmatpush1.xpose.msra.mxu0 0.0
  %478 = vmatprep.subr.mxu0 0.0
  %479 = vmatpush1.xpose.msra.mxu0 0.0
  %480 = vmatprep.subr.mxu0 0.0
  %481 = vmatpush1.xpose.msra.mxu0 0.0
  %482 = vmatprep.subr.mxu0 0.0
  %483 = vmatpush1.xpose.msra.mxu0 0.0
  %484 = vmatprep.subr.mxu0 0.0
  %485 = vmatpush1.xpose.msra.mxu0 0.0
  %486 = vmatprep.subr.mxu0 0.0
  %487 = vmatpush1.xpose.msra.mxu0 0.0
  %488 = vmatprep.subr.mxu0 0.0
  %489 = vmatpush1.xpose.msra.mxu0 0.0
  %490 = vmatprep.subr.mxu0 0.0
  %491 = vmatpush1.xpose.msra.mxu0 0.0
  %492 = vmatprep.subr.mxu0 0.0
  %493 = vmatpush1.xpose.msra.mxu0 0.0
  %494 = vmatprep.subr.mxu0 0.0
  %495 = vmatpush1.xpose.msra.mxu0 0.0
  %496 = vmatprep.subr.mxu0 0.0
  %497 = vmatpush1.xpose.msra.mxu0 0.0
  %498 = vmatprep.mubr.f32.mxu0 0.0
  %499 = vmatmul.mubr.f32.gmra.mrb[0].mxu0 %v111
  %v500 = vpop.f32.mrb[0].mxu0
  %v501 = vadd.f32 0.0, %v500
  %v502 = vpop.f32.mrb[0].mxu0
  %503 = vdwg.mxu0
  %v504 = vsel %vm343, %v501, -inf
  %505 = vmax.xlane.f32.xlu0 %v504
  %v506 = vpop.xlane.xlu0 %505
  %v507 = vsub.f32 %v501, %v506
  %v508 = vmul.f32 %v507, 1.442695
  %v509 = vpow.pop %v508
  %v510 = vsel %vm343, %v509, 0.0
  %511 = vadd.xlane.f32.xlu0 %v510
  %v512 = vpop.xlane.xlu0 %511
  %v513 = vrcp.pop %v512
  %v514 = vmul.f32 %v509, %v513
  %v516 = vsel %vm355, %v514, 0
  %v519 = vsel %vm359, %v265, 0
  %521 = vmatprep.subr.mxu0 0.0
  %522 = vmatpush1.msra.mxu0 %v519
  %523 = vmatprep.subr.mxu0 0.0
  %524 = vmatpush1.msra.mxu0 0.0
  %525 = vmatprep.subr.mxu0 0.0
  %526 = vmatpush1.msra.mxu0 0.0
  %527 = vmatprep.subr.mxu0 0.0
  %528 = vmatpush1.msra.mxu0 0.0
  %529 = vmatprep.subr.mxu0 0.0
  %530 = vmatpush1.msra.mxu0 0.0
  %531 = vmatprep.subr.mxu0 0.0
  %532 = vmatpush1.msra.mxu0 0.0
  %533 = vmatprep.subr.mxu0 0.0
  %534 = vmatpush1.msra.mxu0 0.0
  %535 = vmatprep.subr.mxu0 0.0
  %536 = vmatpush1.msra.mxu0 0.0
  %537 = vmatprep.subr.mxu0 0.0
  %538 = vmatpush1.msra.mxu0 0.0
  %539 = vmatprep.subr.mxu0 0.0
  %540 = vmatpush1.msra.mxu0 0.0
  %541 = vmatprep.subr.mxu0 0.0
  %542 = vmatpush1.msra.mxu0 0.0
  %543 = vmatprep.subr.mxu0 0.0
  %544 = vmatpush1.msra.mxu0 0.0
  %545 = vmatprep.subr.mxu0 0.0
  %546 = vmatpush1.msra.mxu0 0.0
  %547 = vmatprep.subr.mxu0 0.0
  %548 = vmatpush1.msra.mxu0 0.0
  %549 = vmatprep.subr.mxu0 0.0
  %550 = vmatpush1.msra.mxu0 0.0
  %551 = vmatprep.subr.mxu0 0.0
  %552 = vmatpush1.msra.mxu0 0.0
  %553 = vmatprep.subr.mxu0 0.0
  %554 = vmatpush1.msra.mxu0 0.0
  %555 = vmatprep.subr.mxu0 0.0
  %556 = vmatpush1.msra.mxu0 0.0
  %557 = vmatprep.subr.mxu0 0.0
  %558 = vmatpush1.msra.mxu0 0.0
  %559 = vmatprep.subr.mxu0 0.0
  %560 = vmatpush1.msra.mxu0 0.0
  %561 = vmatprep.subr.mxu0 0.0
  %562 = vmatpush1.msra.mxu0 0.0
  %563 = vmatprep.subr.mxu0 0.0
  %564 = vmatpush1.msra.mxu0 0.0
  %565 = vmatprep.subr.mxu0 0.0
  %566 = vmatpush1.msra.mxu0 0.0
  %567 = vmatprep.subr.mxu0 0.0
  %568 = vmatpush1.msra.mxu0 0.0
  %569 = vmatprep.subr.mxu0 0.0
  %570 = vmatpush1.msra.mxu0 0.0
  %571 = vmatprep.subr.mxu0 0.0
  %572 = vmatpush1.msra.mxu0 0.0
  %573 = vmatprep.subr.mxu0 0.0
  %574 = vmatpush1.msra.mxu0 0.0
  %575 = vmatprep.subr.mxu0 0.0
  %576 = vmatpush1.msra.mxu0 0.0
  %577 = vmatprep.subr.mxu0 0.0
  %578 = vmatpush1.msra.mxu0 0.0
  %579 = vmatprep.subr.mxu0 0.0
  %580 = vmatpush1.msra.mxu0 0.0
  %581 = vmatprep.subr.mxu0 0.0
  %582 = vmatpush1.msra.mxu0 0.0
  %583 = vmatprep.subr.mxu0 0.0
  %584 = vmatpush1.msra.mxu0 0.0
  %585 = vmatprep.mubr.f32.mxu0 0.0
  %586 = vmatmul.mubr.f32.gmra.mrb[0].mxu0 %v516
  %v587 = vpop.f32.mrb[0].mxu0
  %v588 = vadd.f32 0.0, %v587
  %v589 = vpop.f32.mrb[0].mxu0
  %590 = vdwg.mxu0
  %591 = vst [vmem:[%s2 + $0x8] sm:$0x3f] %v588
  %vm594 = vcmask 1041408
  %v595 = vrot.slane %v109, 6
  %v596 = vrot.slane %v115, 6
  %v597 = vsel %vm594, %v595, %v596
  %v601 = vrot.slane %v186, 6
  %v602 = vrot.slane %v192, 6
  %v603 = vsel %vm594, %v601, %v602
  %605 = vmatprep.subr.mxu0 0.0
  %606 = vmatpush1.xpose.msra.mxu0 %v603
  %607 = vmatprep.subr.mxu0 0.0
  %608 = vmatpush1.xpose.msra.mxu0 0.0
  %609 = vmatprep.subr.mxu0 0.0
  %610 = vmatpush1.xpose.msra.mxu0 0.0
  %611 = vmatprep.subr.mxu0 0.0
  %612 = vmatpush1.xpose.msra.mxu0 0.0
  %613 = vmatprep.subr.mxu0 0.0
  %614 = vmatpush1.xpose.msra.mxu0 0.0
  %615 = vmatprep.subr.mxu0 0.0
  %616 = vmatpush1.xpose.msra.mxu0 0.0
  %617 = vmatprep.subr.mxu0 0.0
  %618 = vmatpush1.xpose.msra.mxu0 0.0
  %619 = vmatprep.subr.mxu0 0.0
  %620 = vmatpush1.xpose.msra.mxu0 0.0
  %621 = vmatprep.subr.mxu0 0.0
  %622 = vmatpush1.xpose.msra.mxu0 0.0
  %623 = vmatprep.subr.mxu0 0.0
  %624 = vmatpush1.xpose.msra.mxu0 0.0
  %625 = vmatprep.subr.mxu0 0.0
  %626 = vmatpush1.xpose.msra.mxu0 0.0
  %627 = vmatprep.subr.mxu0 0.0
  %628 = vmatpush1.xpose.msra.mxu0 0.0
  %629 = vmatprep.subr.mxu0 0.0
  %630 = vmatpush1.xpose.msra.mxu0 0.0
  %631 = vmatprep.subr.mxu0 0.0
  %632 = vmatpush1.xpose.msra.mxu0 0.0
  %633 = vmatprep.subr.mxu0 0.0
  %634 = vmatpush1.xpose.msra.mxu0 0.0
  %635 = vmatprep.subr.mxu0 0.0
  %636 = vmatpush1.xpose.msra.mxu0 0.0
  %637 = vmatprep.subr.mxu0 0.0
  %638 = vmatpush1.xpose.msra.mxu0 0.0
  %639 = vmatprep.subr.mxu0 0.0
  %640 = vmatpush1.xpose.msra.mxu0 0.0
  %641 = vmatprep.subr.mxu0 0.0
  %642 = vmatpush1.xpose.msra.mxu0 0.0
  %643 = vmatprep.subr.mxu0 0.0
  %644 = vmatpush1.xpose.msra.mxu0 0.0
  %645 = vmatprep.subr.mxu0 0.0
  %646 = vmatpush1.xpose.msra.mxu0 0.0
  %647 = vmatprep.subr.mxu0 0.0
  %648 = vmatpush1.xpose.msra.mxu0 0.0
  %649 = vmatprep.subr.mxu0 0.0
  %650 = vmatpush1.xpose.msra.mxu0 0.0
  %651 = vmatprep.subr.mxu0 0.0
  %652 = vmatpush1.xpose.msra.mxu0 0.0
  %653 = vmatprep.subr.mxu0 0.0
  %654 = vmatpush1.xpose.msra.mxu0 0.0
  %655 = vmatprep.subr.mxu0 0.0
  %656 = vmatpush1.xpose.msra.mxu0 0.0
  %657 = vmatprep.subr.mxu0 0.0
  %658 = vmatpush1.xpose.msra.mxu0 0.0
  %659 = vmatprep.subr.mxu0 0.0
  %660 = vmatpush1.xpose.msra.mxu0 0.0
  %661 = vmatprep.subr.mxu0 0.0
  %662 = vmatpush1.xpose.msra.mxu0 0.0
  %663 = vmatprep.subr.mxu0 0.0
  %664 = vmatpush1.xpose.msra.mxu0 0.0
  %665 = vmatprep.subr.mxu0 0.0
  %666 = vmatpush1.xpose.msra.mxu0 0.0
  %667 = vmatprep.subr.mxu0 0.0
  %668 = vmatpush1.xpose.msra.mxu0 0.0
  %669 = vmatprep.mubr.f32.mxu0 0.0
  %670 = vmatmul.mubr.f32.gmra.mrb[0].mxu0 %v597
  %v671 = vpop.f32.mrb[0].mxu0
  %v672 = vadd.f32 0.0, %v671
  %v673 = vpop.f32.mrb[0].mxu0
  %674 = vdwg.mxu0
  %v675 = vsel %vm343, %v672, -inf
  %676 = vmax.xlane.f32.xlu0 %v675
  %v677 = vpop.xlane.xlu0 %676
  %v678 = vsub.f32 %v672, %v677
  %v679 = vmul.f32 %v678, 1.442695
  %v680 = vpow.pop %v679
  %v681 = vsel %vm343, %v680, 0.0
  %682 = vadd.xlane.f32.xlu0 %v681
  %v683 = vpop.xlane.xlu0 %682
  %v684 = vrcp.pop %v683
  %v685 = vmul.f32 %v680, %v684
  %v687 = vrot.slane %v263, 6
  %v688 = vrot.slane %v269, 6
  %v689 = vsel %vm594, %v687, %v688
  %v691 = vsel %vm355, %v685, 0
  %v693 = vsel %vm359, %v689, 0
  %695 = vmatprep.subr.mxu0 0.0
  %696 = vmatpush1.msra.mxu0 %v693
  %697 = vmatprep.subr.mxu0 0.0
  %698 = vmatpush1.msra.mxu0 0.0
  %699 = vmatprep.subr.mxu0 0.0
  %700 = vmatpush1.msra.mxu0 0.0
  %701 = vmatprep.subr.mxu0 0.0
  %702 = vmatpush1.msra.mxu0 0.0
  %703 = vmatprep.subr.mxu0 0.0
  %704 = vmatpush1.msra.mxu0 0.0
  %705 = vmatprep.subr.mxu0 0.0
  %706 = vmatpush1.msra.mxu0 0.0
  %707 = vmatprep.subr.mxu0 0.0
  %708 = vmatpush1.msra.mxu0 0.0
  %709 = vmatprep.subr.mxu0 0.0
  %710 = vmatpush1.msra.mxu0 0.0
  %711 = vmatprep.subr.mxu0 0.0
  %712 = vmatpush1.msra.mxu0 0.0
  %713 = vmatprep.subr.mxu0 0.0
  %714 = vmatpush1.msra.mxu0 0.0
  %715 = vmatprep.subr.mxu0 0.0
  %716 = vmatpush1.msra.mxu0 0.0
  %717 = vmatprep.subr.mxu0 0.0
  %718 = vmatpush1.msra.mxu0 0.0
  %719 = vmatprep.subr.mxu0 0.0
  %720 = vmatpush1.msra.mxu0 0.0
  %721 = vmatprep.subr.mxu0 0.0
  %722 = vmatpush1.msra.mxu0 0.0
  %723 = vmatprep.subr.mxu0 0.0
  %724 = vmatpush1.msra.mxu0 0.0
  %725 = vmatprep.subr.mxu0 0.0
  %726 = vmatpush1.msra.mxu0 0.0
  %727 = vmatprep.subr.mxu0 0.0
  %728 = vmatpush1.msra.mxu0 0.0
  %729 = vmatprep.subr.mxu0 0.0
  %730 = vmatpush1.msra.mxu0 0.0
  %731 = vmatprep.subr.mxu0 0.0
  %732 = vmatpush1.msra.mxu0 0.0
  %733 = vmatprep.subr.mxu0 0.0
  %734 = vmatpush1.msra.mxu0 0.0
  %735 = vmatprep.subr.mxu0 0.0
  %736 = vmatpush1.msra.mxu0 0.0
  %737 = vmatprep.subr.mxu0 0.0
  %738 = vmatpush1.msra.mxu0 0.0
  %739 = vmatprep.subr.mxu0 0.0
  %740 = vmatpush1.msra.mxu0 0.0
  %741 = vmatprep.subr.mxu0 0.0
  %742 = vmatpush1.msra.mxu0 0.0
  %743 = vmatprep.subr.mxu0 0.0
  %744 = vmatpush1.msra.mxu0 0.0
  %745 = vmatprep.subr.mxu0 0.0
  %746 = vmatpush1.msra.mxu0 0.0
  %747 = vmatprep.subr.mxu0 0.0
  %748 = vmatpush1.msra.mxu0 0.0
  %749 = vmatprep.subr.mxu0 0.0
  %750 = vmatpush1.msra.mxu0 0.0
  %751 = vmatprep.subr.mxu0 0.0
  %752 = vmatpush1.msra.mxu0 0.0
  %753 = vmatprep.subr.mxu0 0.0
  %754 = vmatpush1.msra.mxu0 0.0
  %755 = vmatprep.subr.mxu0 0.0
  %756 = vmatpush1.msra.mxu0 0.0
  %757 = vmatprep.subr.mxu0 0.0
  %758 = vmatpush1.msra.mxu0 0.0
  %759 = vmatprep.mubr.f32.mxu0 0.0
  %760 = vmatmul.mubr.f32.gmra.mrb[0].mxu0 %v691
  %v761 = vpop.f32.mrb[0].mxu0
  %v762 = vadd.f32 0.0, %v761
  %v763 = vpop.f32.mrb[0].mxu0
  %764 = vdwg.mxu0
  %v766 = vrot.slane %v762, 2
  %768 = vst [vmem:[%s2] sm:$0xc0] %v766
  %769 = vst [vmem:[%s2 + $0x10] sm:$0xf] %v766
  %v772 = vrot.slane %v111, 6
  %v773 = vrot.slane %v117, 6
  %v774 = vsel %vm594, %v772, %v773
  %v778 = vrot.slane %v188, 6
  %v779 = vrot.slane %v194, 6
  %v780 = vsel %vm594, %v778, %v779
  %782 = vmatprep.subr.mxu0 0.0
  %783 = vmatpush1.xpose.msra.mxu0 %v780
  %784 = vmatprep.subr.mxu0 0.0
  %785 = vmatpush1.xpose.msra.mxu0 0.0
  %786 = vmatprep.subr.mxu0 0.0
  %787 = vmatpush1.xpose.msra.mxu0 0.0
  %788 = vmatprep.subr.mxu0 0.0
  %789 = vmatpush1.xpose.msra.mxu0 0.0
  %790 = vmatprep.subr.mxu0 0.0
  %791 = vmatpush1.xpose.msra.mxu0 0.0
  %792 = vmatprep.subr.mxu0 0.0
  %793 = vmatpush1.xpose.msra.mxu0 0.0
  %794 = vmatprep.subr.mxu0 0.0
  %795 = vmatpush1.xpose.msra.mxu0 0.0
  %796 = vmatprep.subr.mxu0 0.0
  %797 = vmatpush1.xpose.msra.mxu0 0.0
  %798 = vmatprep.subr.mxu0 0.0
  %799 = vmatpush1.xpose.msra.mxu0 0.0
  %800 = vmatprep.subr.mxu0 0.0
  %801 = vmatpush1.xpose.msra.mxu0 0.0
  %802 = vmatprep.subr.mxu0 0.0
  %803 = vmatpush1.xpose.msra.mxu0 0.0
  %804 = vmatprep.subr.mxu0 0.0
  %805 = vmatpush1.xpose.msra.mxu0 0.0
  %806 = vmatprep.subr.mxu0 0.0
  %807 = vmatpush1.xpose.msra.mxu0 0.0
  %808 = vmatprep.subr.mxu0 0.0
  %809 = vmatpush1.xpose.msra.mxu0 0.0
  %810 = vmatprep.subr.mxu0 0.0
  %811 = vmatpush1.xpose.msra.mxu0 0.0
  %812 = vmatprep.subr.mxu0 0.0
  %813 = vmatpush1.xpose.msra.mxu0 0.0
  %814 = vmatprep.subr.mxu0 0.0
  %815 = vmatpush1.xpose.msra.mxu0 0.0
  %816 = vmatprep.subr.mxu0 0.0
  %817 = vmatpush1.xpose.msra.mxu0 0.0
  %818 = vmatprep.subr.mxu0 0.0
  %819 = vmatpush1.xpose.msra.mxu0 0.0
  %820 = vmatprep.subr.mxu0 0.0
  %821 = vmatpush1.xpose.msra.mxu0 0.0
  %822 = vmatprep.subr.mxu0 0.0
  %823 = vmatpush1.xpose.msra.mxu0 0.0
  %824 = vmatprep.subr.mxu0 0.0
  %825 = vmatpush1.xpose.msra.mxu0 0.0
  %826 = vmatprep.subr.mxu0 0.0
  %827 = vmatpush1.xpose.msra.mxu0 0.0
  %828 = vmatprep.subr.mxu0 0.0
  %829 = vmatpush1.xpose.msra.mxu0 0.0
  %830 = vmatprep.subr.mxu0 0.0
  %831 = vmatpush1.xpose.msra.mxu0 0.0
  %832 = vmatprep.subr.mxu0 0.0
  %833 = vmatpush1.xpose.msra.mxu0 0.0
  %834 = vmatprep.subr.mxu0 0.0
  %835 = vmatpush1.xpose.msra.mxu0 0.0
  %836 = vmatprep.subr.mxu0 0.0
  %837 = vmatpush1.xpose.msra.mxu0 0.0
  %838 = vmatprep.subr.mxu0 0.0
  %839 = vmatpush1.xpose.msra.mxu0 0.0
  %840 = vmatprep.subr.mxu0 0.0
  %841 = vmatpush1.xpose.msra.mxu0 0.0
  %842 = vmatprep.subr.mxu0 0.0
  %843 = vmatpush1.xpose.msra.mxu0 0.0
  %844 = vmatprep.subr.mxu0 0.0
  %845 = vmatpush1.xpose.msra.mxu0 0.0
  %846 = vmatprep.mubr.f32.mxu0 0.0
  %847 = vmatmul.mubr.f32.gmra.mrb[0].mxu0 %v774
  %v848 = vpop.f32.mrb[0].mxu0
  %v849 = vadd.f32 0.0, %v848
  %v850 = vpop.f32.mrb[0].mxu0
  %851 = vdwg.mxu0
  %v852 = vsel %vm343, %v849, -inf
  %853 = vmax.xlane.f32.xlu0 %v852
  %v854 = vpop.xlane.xlu0 %853
  %v855 = vsub.f32 %v849, %v854
  %v856 = vmul.f32 %v855, 1.442695
  %v857 = vpow.pop %v856
  %v858 = vsel %vm343, %v857, 0.0
  %859 = vadd.xlane.f32.xlu0 %v858
  %v860 = vpop.xlane.xlu0 %859
  %v861 = vrcp.pop %v860
  %v862 = vmul.f32 %v857, %v861
  %v864 = vrot.slane %v265, 6
  %v865 = vrot.slane %v271, 6
  %v866 = vsel %vm594, %v864, %v865
  %v868 = vsel %vm355, %v862, 0
  %v870 = vsel %vm359, %v866, 0
  %872 = vmatprep.subr.mxu0 0.0
  %873 = vmatpush1.msra.mxu0 %v870
  %874 = vmatprep.subr.mxu0 0.0
  %875 = vmatpush1.msra.mxu0 0.0
  %876 = vmatprep.subr.mxu0 0.0
  %877 = vmatpush1.msra.mxu0 0.0
  %878 = vmatprep.subr.mxu0 0.0
  %879 = vmatpush1.msra.mxu0 0.0
  %880 = vmatprep.subr.mxu0 0.0
  %881 = vmatpush1.msra.mxu0 0.0
  %882 = vmatprep.subr.mxu0 0.0
  %883 = vmatpush1.msra.mxu0 0.0
  %884 = vmatprep.subr.mxu0 0.0
  %885 = vmatpush1.msra.mxu0 0.0
  %886 = vmatprep.subr.mxu0 0.0
  %887 = vmatpush1.msra.mxu0 0.0
  %888 = vmatprep.subr.mxu0 0.0
  %889 = vmatpush1.msra.mxu0 0.0
  %890 = vmatprep.subr.mxu0 0.0
  %891 = vmatpush1.msra.mxu0 0.0
  %892 = vmatprep.subr.mxu0 0.0
  %893 = vmatpush1.msra.mxu0 0.0
  %894 = vmatprep.subr.mxu0 0.0
  %895 = vmatpush1.msra.mxu0 0.0
  %896 = vmatprep.subr.mxu0 0.0
  %897 = vmatpush1.msra.mxu0 0.0
  %898 = vmatprep.subr.mxu0 0.0
  %899 = vmatpush1.msra.mxu0 0.0
  %900 = vmatprep.subr.mxu0 0.0
  %901 = vmatpush1.msra.mxu0 0.0
  %902 = vmatprep.subr.mxu0 0.0
  %903 = vmatpush1.msra.mxu0 0.0
  %904 = vmatprep.subr.mxu0 0.0
  %905 = vmatpush1.msra.mxu0 0.0
  %906 = vmatprep.subr.mxu0 0.0
  %907 = vmatpush1.msra.mxu0 0.0
  %908 = vmatprep.subr.mxu0 0.0
  %909 = vmatpush1.msra.mxu0 0.0
  %910 = vmatprep.subr.mxu0 0.0
  %911 = vmatpush1.msra.mxu0 0.0
  %912 = vmatprep.subr.mxu0 0.0
  %913 = vmatpush1.msra.mxu0 0.0
  %914 = vmatprep.subr.mxu0 0.0
  %915 = vmatpush1.msra.mxu0 0.0
  %916 = vmatprep.subr.mxu0 0.0
  %917 = vmatpush1.msra.mxu0 0.0
  %918 = vmatprep.subr.mxu0 0.0
  %919 = vmatpush1.msra.mxu0 0.0
  %920 = vmatprep.subr.mxu0 0.0
  %921 = vmatpush1.msra.mxu0 0.0
  %922 = vmatprep.subr.mxu0 0.0
  %923 = vmatpush1.msra.mxu0 0.0
  %924 = vmatprep.subr.mxu0 0.0
  %925 = vmatpush1.msra.mxu0 0.0
  %926 = vmatprep.subr.mxu0 0.0
  %927 = vmatpush1.msra.mxu0 0.0
  %928 = vmatprep.subr.mxu0 0.0
  %929 = vmatpush1.msra.mxu0 0.0
  %930 = vmatprep.subr.mxu0 0.0
  %931 = vmatpush1.msra.mxu0 0.0
  %932 = vmatprep.subr.mxu0 0.0
  %933 = vmatpush1.msra.mxu0 0.0
  %934 = vmatprep.subr.mxu0 0.0
  %935 = vmatpush1.msra.mxu0 0.0
  %936 = vmatprep.mubr.f32.mxu0 0.0
  %937 = vmatmul.mubr.f32.gmra.mrb[0].mxu0 %v868
  %v938 = vpop.f32.mrb[0].mxu0
  %v939 = vadd.f32 0.0, %v938
  %v940 = vpop.f32.mrb[0].mxu0
  %941 = vdwg.mxu0
  %v943 = vrot.slane %v939, 2
  %945 = vst [vmem:[%s2 + $0x8] sm:$0xc0] %v943
  %946 = vst [vmem:[%s2 + $0x18] sm:$0xf] %v943
  // Predicated region
  $region10: #{multi_head_attention.1} parent=0 // pred_check
    _
  $region11: #{multi_head_attention.1} parent=0 // pred_check_branch
    %948 = sbr.rel (0) target = $region13
  $region12: #{multi_head_attention.1} parent=0 // pred_region
    _
  $region13: #{multi_head_attention.1} parent=0 // pred_fallthru
    _
  // Predicated region
  $region14: #{multi_head_attention.1} parent=0 // pred_check
    _
  $region15: #{multi_head_attention.1} parent=0 // pred_check_branch
    %950 = sbr.rel (0) target = $region17
  $region16: #{multi_head_attention.1} parent=0 // pred_region
    _
  $region17: #{multi_head_attention.1} parent=0 // pred_fallthru
    _

</llo_original>
